<compile_context>
chip_gen: v5e
topology: v5e:2x2
jax: 0.10.0
libtpu: 0.0.40
codegen_flags: <defaults>
</compile_context>

<pallas_src>
import functools

import jax
import jax.numpy as jnp
from jax import lax
from jax.experimental import pallas as pl
from jax.experimental.pallas import tpu as pltpu


def _round_up(x, m):
    return (x + m - 1) // m * m


def _pick_row_tile(hout, wout, cin, cout, k, budget_bytes=24 << 20):
    """Largest divisor of `hout` whose per-step VMEM working set fits the budget."""
    wp1 = wout + 1
    best = 1
    for rt in range(1, hout + 1):
        if hout % rt:
            continue
        lq = rt * wp1
        lpad = _round_up((rt + 1) * wp1 + 1, 128)
        band_in = 4 * cin * lpad * 2                # bf16 phase-split input block
        patches = 2 * (k * k * cin) * 4 * lq * 2    # in-kernel patch matrix (+slack for slabs)
        acc = cout * 4 * lq * 4                     # f32 matmul result
        out_blk = cout * lq * 4                     # f32 output block
        total = 2 * band_in + patches + acc + 2 * out_blk + (1 << 20)
        if total <= budget_bytes:
            best = rt
    return best


def _conv_bn_relu_pool_kernel(x_ref, w_ref, b_ref, o_ref, *, rt, wp1, cin, k):
    """One grid step = one (image, pooled-row-band) pair.

    x_ref : (1, 1, 4*Cin, Lpad)   phase-split padded input band, bf16.
                                  row (2*a + b)*Cin + ci holds xpad[ci, 2r+a, 2c+b],
                                  flattened over (r, c) with row width wp1 = Wout+1.
    w_ref : (Cout, K*K*Cin)       conv weights with BN scale folded in, bf16, rows (kh, kw, ci).
    b_ref : (Cout, 1)             folded conv+BN bias, f32.
    o_ref : (1, 1, Cout, rt*wp1)  pooled output band (one garbage column per pooled row,
                                  dropped by the wrapper), f32.
    """
    lq = rt * wp1
    xb = x_ref[0, 0]                      # (4*Cin, Lpad) bf16
    w = w_ref[...]                        # (Cout, K*K*Cin) bf16
    bias = b_ref[...]                     # (Cout, 1) f32

    # In-kernel im2col: columns grouped by 2x2 pool offset (dh, dw); every tap is a
    # contiguous static slice of the flattened phase image (no strided access needed).
    groups = []
    for dh in range(2):
        for dw in range(2):
            slabs = []
            for kh in range(k):
                for kw in range(k):
                    a, s_r = (dh + kh) & 1, (dh + kh) >> 1
                    b, s_c = (dw + kw) & 1, (dw + kw) >> 1
                    row0 = (2 * a + b) * cin
                    off = s_r * wp1 + s_c
                    slabs.append(xb[row0:row0 + cin, off:off + lq])   # (Cin, lq)
            groups.append(jnp.concatenate(slabs, axis=0))             # (K*K*Cin, lq)
    patches = jnp.concatenate(groups, axis=1)                          # (K*K*Cin, 4*lq)

    # Single fused MXU matmul (bf16 in, f32 accumulate): scaled conv for all 4 pool offsets.
    acc = jnp.dot(w, patches, preferred_element_type=jnp.float32)      # (Cout, 4*lq)

    # 2x2 max-pool = elementwise max over the 4 contiguous offset groups (lane slices).
    pooled = jnp.maximum(jnp.maximum(acc[:, 0 * lq:1 * lq], acc[:, 1 * lq:2 * lq]),
                         jnp.maximum(acc[:, 2 * lq:3 * lq], acc[:, 3 * lq:4 * lq]))

    # bias + ReLU after the max (monotone => identical to BN->ReLU->MaxPool ordering).
    o_ref[0, 0] = jnp.maximum(pooled + bias, 0.0).astype(o_ref.dtype)


def conv_block_forward(x, w_conv, b_conv, gamma, beta, run_mean, run_var, eps=1e-5,
                       vmem_budget_bytes=24 << 20):
    """ConvBlock forward. x: (N, Cin, H, W) f32 NCHW -> (N, Cout, H//2, W//2) f32."""
    N, Cin, H, W = x.shape
    Cout, Cin2, K, K2 = w_conv.shape
    assert Cin2 == Cin and K == K2 == 3, "kernel implements the module defaults: 3x3, stride 1, pad 1"
    assert H % 2 == 0 and W % 2 == 0
    Hout, Wout = H // 2, W // 2
    Wp1 = Wout + 1

    # ---- fold conv bias + eval-mode BatchNorm into the weights / one bias --------------
    scale = gamma * lax.rsqrt(run_var + eps)                          # (Cout,)
    bias = ((b_conv - run_mean) * scale + beta).reshape(Cout, 1).astype(jnp.float32)
    w_mat = (w_conv * scale[:, None, None, None])                     # BN scale folded in
    w_mat = w_mat.transpose(0, 2, 3, 1).reshape(Cout, K * K * Cin).astype(jnp.bfloat16)

    # ---- pixel-unshuffle the zero-padded input into the 4 pooling phases ----------------
    xpad = jnp.pad(x, ((0, 0), (0, 0), (1, 1), (1, 1)))               # (N, Cin, H+2, W+2)
    xph = xpad.reshape(N, Cin, Hout + 1, 2, Wp1, 2)
    xph = xph.transpose(0, 3, 5, 1, 2, 4)                             # (N, 2, 2, Cin, Hout+1, Wp1)
    xph = xph.reshape(N, 4 * Cin, Hout + 1, Wp1)

    # ---- split pooled rows into bands (1-row halo) to bound the VMEM working set --------
    rt = _pick_row_tile(Hout, Wout, Cin, Cout, K, vmem_budget_bytes)
    n_bands = Hout // rt
    bands = [xph[:, :, t * rt:t * rt + rt + 1, :] for t in range(n_bands)]
    xb = jnp.stack(bands, axis=1)                                     # (N, nb, 4*Cin, rt+1, Wp1)
    Lp = (rt + 1) * Wp1
    Lpad = _round_up(Lp + 1, 128)
    xb = xb.reshape(N, n_bands, 4 * Cin, Lp)
    xb = jnp.pad(xb, ((0, 0), (0, 0), (0, 0), (0, Lpad - Lp))).astype(jnp.bfloat16)

    # ---- Pallas hot path: im2col + matmul + bias + ReLU + maxpool ------------------------
    Lq = rt * Wp1
    kernel = functools.partial(_conv_bn_relu_pool_kernel, rt=rt, wp1=Wp1, cin=Cin, k=K)
    out = pl.pallas_call(
        kernel,
        out_shape=jax.ShapeDtypeStruct((N, n_bands, Cout, Lq), jnp.float32),
        grid=(N, n_bands),
        in_specs=[
            pl.BlockSpec((1, 1, 4 * Cin, Lpad), lambda n, t: (n, t, 0, 0)),
            pl.BlockSpec((Cout, K * K * Cin), lambda n, t: (0, 0)),
            pl.BlockSpec((Cout, 1), lambda n, t: (0, 0)),
        ],
        out_specs=pl.BlockSpec((1, 1, Cout, Lq), lambda n, t: (n, t, 0, 0)),
        compiler_params=pltpu.CompilerParams(
            dimension_semantics=("parallel", "parallel"),
            vmem_limit_bytes=48 * 1024 * 1024,
        ),
    )(xb, w_mat, bias)

    # drop the per-row garbage column and fold bands back into NCHW (no big transpose).
    out = out.reshape(N, n_bands, Cout, rt, Wp1)[..., :Wout]
    return out.transpose(0, 2, 1, 3, 4).reshape(N, Cout, Hout, Wout)


def _reference(x, w_conv, b_conv, gamma, beta, run_mean, run_var, eps=1e-5):
    """Pure-JAX f32 reference of the same forward (eval-mode BN)."""
    y = lax.conv_general_dilated(
        x, w_conv, window_strides=(1, 1), padding=((1, 1), (1, 1)),
        dimension_numbers=("NCHW", "OIHW", "NCHW"))
    y = y + b_conv[None, :, None, None]
    y = (y - run_mean[None, :, None, None]) / jnp.sqrt(run_var[None, :, None, None] + eps)
    y = y * gamma[None, :, None, None] + beta[None, :, None, None]
    y = jnp.maximum(y, 0.0)
    N, C, H, W = y.shape
    return y.reshape(N, C, H // 2, 2, W // 2, 2).max(axis=(3, 5))


if __name__ == "__main__":
    key = jax.random.PRNGKey(0)
    k_x, k_w, k_b, k_g, k_be, k_m, k_v = jax.random.split(key, 7)

    N, Cin, Cout, H, W, K = 2, 4, 8, 16, 16, 3

    x = jax.random.normal(k_x, (N, Cin, H, W), dtype=jnp.float32)
    w_conv = jax.random.normal(k_w, (Cout, Cin, K, K), dtype=jnp.float32) * 0.1
    b_conv = jax.random.normal(k_b, (Cout,), dtype=jnp.float32) * 0.1
    gamma = 1.0 + 0.1 * jax.random.normal(k_g, (Cout,), dtype=jnp.float32)
    beta = 0.1 * jax.random.normal(k_be, (Cout,), dtype=jnp.float32)
    run_mean = 0.1 * jax.random.normal(k_m, (Cout,), dtype=jnp.float32)
    run_var = jnp.abs(jax.random.normal(k_v, (Cout,), dtype=jnp.float32)) + 0.5

    out = conv_block_forward(x, w_conv, b_conv, gamma, beta, run_mean, run_var)
    out = jax.block_until_ready(out)

    ref = _reference(x, w_conv, b_conv, gamma, beta, run_mean, run_var)
    assert out.shape == (N, Cout, H // 2, W // 2), out.shape
    max_err = float(jnp.max(jnp.abs(out - ref)))
    # bf16 MXU operands -> looser tolerance than the f32 reference.
    assert jnp.allclose(out, ref, atol=5e-2, rtol=5e-2), max_err

    print("KERNEL_OK")
</pallas_src>

<mosaic_0001>
module attributes {stable_mosaic.version = 11 : i64} {
  func.func @_conv_bn_relu_pool_kernel(%arg0: i32, %arg1: i32, %arg2: memref<1x1x16x128xbf16, #tpu.memory_space<vmem>>, %arg3: memref<8x36xbf16, #tpu.memory_space<vmem>>, %arg4: memref<8x1xf32, #tpu.memory_space<vmem>>, %arg5: memref<1x1x8x72xf32, #tpu.memory_space<vmem>>) attributes {dimension_semantics = [#tpu.dimension_semantics<parallel>, #tpu.dimension_semantics<parallel>], iteration_bounds = array<i64: 2, 1>, scalar_prefetch = 0 : i64, scratch_operands = 0 : i64, tpu.core_type = #tpu.core_type<tc>, window_params = [{transform_indices = @transform_0, window_bounds = array<i64: 1, 1, 16, 128>}, {pipeline_mode = #tpu.pipeline_mode<synchronous>, transform_indices = @transform_1, window_bounds = array<i64: 8, 36>}, {pipeline_mode = #tpu.pipeline_mode<synchronous>, transform_indices = @transform_2, window_bounds = array<i64: 8, 1>}, {transform_indices = @transform_3, window_bounds = array<i64: 1, 1, 8, 72>}]} {
    %c0 = arith.constant 0 : index
    %c0_0 = arith.constant 0 : index
    %c0_1 = arith.constant 0 : index
    %c0_2 = arith.constant 0 : index
    %0 = vector.load %arg2[%c0, %c0_0, %c0_1, %c0_2] : memref<1x1x16x128xbf16, #tpu.memory_space<vmem>>, vector<1x1x16x128xbf16>
    %1 = vector.shape_cast %0 : vector<1x1x16x128xbf16> to vector<16x128xbf16>
    %c0_3 = arith.constant 0 : index
    %c0_4 = arith.constant 0 : index
    %2 = vector.load %arg3[%c0_3, %c0_4] : memref<8x36xbf16, #tpu.memory_space<vmem>>, vector<8x36xbf16>
    %c0_5 = arith.constant 0 : index
    %c0_6 = arith.constant 0 : index
    %3 = vector.load %arg4[%c0_5, %c0_6] : memref<8x1xf32, #tpu.memory_space<vmem>>, vector<8x1xf32>
    %4 = vector.extract_strided_slice %1 {offsets = [0, 0], sizes = [4, 72], strides = [1, 1]} : vector<16x128xbf16> to vector<4x72xbf16>
    %5 = vector.extract_strided_slice %1 {offsets = [4, 0], sizes = [4, 72], strides = [1, 1]} : vector<16x128xbf16> to vector<4x72xbf16>
    %6 = vector.extract_strided_slice %1 {offsets = [0, 1], sizes = [4, 72], strides = [1, 1]} : vector<16x128xbf16> to vector<4x72xbf16>
    %7 = vector.extract_strided_slice %1 {offsets = [8, 0], sizes = [4, 72], strides = [1, 1]} : vector<16x128xbf16> to vector<4x72xbf16>
    %8 = vector.extract_strided_slice %1 {offsets = [12, 0], sizes = [4, 72], strides = [1, 1]} : vector<16x128xbf16> to vector<4x72xbf16>
    %9 = vector.extract_strided_slice %1 {offsets = [8, 1], sizes = [4, 72], strides = [1, 1]} : vector<16x128xbf16> to vector<4x72xbf16>
    %10 = vector.extract_strided_slice %1 {offsets = [0, 9], sizes = [4, 72], strides = [1, 1]} : vector<16x128xbf16> to vector<4x72xbf16>
    %11 = vector.extract_strided_slice %1 {offsets = [4, 9], sizes = [4, 72], strides = [1, 1]} : vector<16x128xbf16> to vector<4x72xbf16>
    %12 = vector.extract_strided_slice %1 {offsets = [0, 10], sizes = [4, 72], strides = [1, 1]} : vector<16x128xbf16> to vector<4x72xbf16>
    %13 = tpu.concatenate %4, %5, %6, %7, %8, %9, %10, %11, %12 in 0 : vector<4x72xbf16>, vector<4x72xbf16>, vector<4x72xbf16>, vector<4x72xbf16>, vector<4x72xbf16>, vector<4x72xbf16>, vector<4x72xbf16>, vector<4x72xbf16>, vector<4x72xbf16> -> vector<36x72xbf16>
    %14 = vector.extract_strided_slice %1 {offsets = [4, 0], sizes = [4, 72], strides = [1, 1]} : vector<16x128xbf16> to vector<4x72xbf16>
    %15 = vector.extract_strided_slice %1 {offsets = [0, 1], sizes = [4, 72], strides = [1, 1]} : vector<16x128xbf16> to vector<4x72xbf16>
    %16 = vector.extract_strided_slice %1 {offsets = [4, 1], sizes = [4, 72], strides = [1, 1]} : vector<16x128xbf16> to vector<4x72xbf16>
    %17 = vector.extract_strided_slice %1 {offsets = [12, 0], sizes = [4, 72], strides = [1, 1]} : vector<16x128xbf16> to vector<4x72xbf16>
    %18 = vector.extract_strided_slice %1 {offsets = [8, 1], sizes = [4, 72], strides = [1, 1]} : vector<16x128xbf16> to vector<4x72xbf16>
    %19 = vector.extract_strided_slice %1 {offsets = [12, 1], sizes = [4, 72], strides = [1, 1]} : vector<16x128xbf16> to vector<4x72xbf16>
    %20 = vector.extract_strided_slice %1 {offsets = [4, 9], sizes = [4, 72], strides = [1, 1]} : vector<16x128xbf16> to vector<4x72xbf16>
    %21 = vector.extract_strided_slice %1 {offsets = [0, 10], sizes = [4, 72], strides = [1, 1]} : vector<16x128xbf16> to vector<4x72xbf16>
    %22 = vector.extract_strided_slice %1 {offsets = [4, 10], sizes = [4, 72], strides = [1, 1]} : vector<16x128xbf16> to vector<4x72xbf16>
    %23 = tpu.concatenate %14, %15, %16, %17, %18, %19, %20, %21, %22 in 0 : vector<4x72xbf16>, vector<4x72xbf16>, vector<4x72xbf16>, vector<4x72xbf16>, vector<4x72xbf16>, vector<4x72xbf16>, vector<4x72xbf16>, vector<4x72xbf16>, vector<4x72xbf16> -> vector<36x72xbf16>
    %24 = vector.extract_strided_slice %1 {offsets = [8, 0], sizes = [4, 72], strides = [1, 1]} : vector<16x128xbf16> to vector<4x72xbf16>
    %25 = vector.extract_strided_slice %1 {offsets = [12, 0], sizes = [4, 72], strides = [1, 1]} : vector<16x128xbf16> to vector<4x72xbf16>
    %26 = vector.extract_strided_slice %1 {offsets = [8, 1], sizes = [4, 72], strides = [1, 1]} : vector<16x128xbf16> to vector<4x72xbf16>
    %27 = vector.extract_strided_slice %1 {offsets = [0, 9], sizes = [4, 72], strides = [1, 1]} : vector<16x128xbf16> to vector<4x72xbf16>
    %28 = vector.extract_strided_slice %1 {offsets = [4, 9], sizes = [4, 72], strides = [1, 1]} : vector<16x128xbf16> to vector<4x72xbf16>
    %29 = vector.extract_strided_slice %1 {offsets = [0, 10], sizes = [4, 72], strides = [1, 1]} : vector<16x128xbf16> to vector<4x72xbf16>
    %30 = vector.extract_strided_slice %1 {offsets = [8, 9], sizes = [4, 72], strides = [1, 1]} : vector<16x128xbf16> to vector<4x72xbf16>
    %31 = vector.extract_strided_slice %1 {offsets = [12, 9], sizes = [4, 72], strides = [1, 1]} : vector<16x128xbf16> to vector<4x72xbf16>
    %32 = vector.extract_strided_slice %1 {offsets = [8, 10], sizes = [4, 72], strides = [1, 1]} : vector<16x128xbf16> to vector<4x72xbf16>
    %33 = tpu.concatenate %24, %25, %26, %27, %28, %29, %30, %31, %32 in 0 : vector<4x72xbf16>, vector<4x72xbf16>, vector<4x72xbf16>, vector<4x72xbf16>, vector<4x72xbf16>, vector<4x72xbf16>, vector<4x72xbf16>, vector<4x72xbf16>, vector<4x72xbf16> -> vector<36x72xbf16>
    %34 = vector.extract_strided_slice %1 {offsets = [12, 0], sizes = [4, 72], strides = [1, 1]} : vector<16x128xbf16> to vector<4x72xbf16>
    %35 = vector.extract_strided_slice %1 {offsets = [8, 1], sizes = [4, 72], strides = [1, 1]} : vector<16x128xbf16> to vector<4x72xbf16>
    %36 = vector.extract_strided_slice %1 {offsets = [12, 1], sizes = [4, 72], strides = [1, 1]} : vector<16x128xbf16> to vector<4x72xbf16>
    %37 = vector.extract_strided_slice %1 {offsets = [4, 9], sizes = [4, 72], strides = [1, 1]} : vector<16x128xbf16> to vector<4x72xbf16>
    %38 = vector.extract_strided_slice %1 {offsets = [0, 10], sizes = [4, 72], strides = [1, 1]} : vector<16x128xbf16> to vector<4x72xbf16>
    %39 = vector.extract_strided_slice %1 {offsets = [4, 10], sizes = [4, 72], strides = [1, 1]} : vector<16x128xbf16> to vector<4x72xbf16>
    %40 = vector.extract_strided_slice %1 {offsets = [12, 9], sizes = [4, 72], strides = [1, 1]} : vector<16x128xbf16> to vector<4x72xbf16>
    %41 = vector.extract_strided_slice %1 {offsets = [8, 10], sizes = [4, 72], strides = [1, 1]} : vector<16x128xbf16> to vector<4x72xbf16>
    %42 = vector.extract_strided_slice %1 {offsets = [12, 10], sizes = [4, 72], strides = [1, 1]} : vector<16x128xbf16> to vector<4x72xbf16>
    %43 = tpu.concatenate %34, %35, %36, %37, %38, %39, %40, %41, %42 in 0 : vector<4x72xbf16>, vector<4x72xbf16>, vector<4x72xbf16>, vector<4x72xbf16>, vector<4x72xbf16>, vector<4x72xbf16>, vector<4x72xbf16>, vector<4x72xbf16>, vector<4x72xbf16> -> vector<36x72xbf16>
    %44 = tpu.concatenate %13, %23, %33, %43 in 1 : vector<36x72xbf16>, vector<36x72xbf16>, vector<36x72xbf16>, vector<36x72xbf16> -> vector<36x288xbf16>
    %cst = arith.constant dense<0.000000e+00> : vector<8x288xf32>
    %45 = tpu.matmul %2, %44, %cst {dimension_numbers = #tpu.dot_dimension_numbers<[1], [0], [0], [1], [0, 0, 1, 1], [], []>} : vector<8x36xbf16>, vector<36x288xbf16>, vector<8x288xf32> -> vector<8x288xf32>
    %46 = vector.extract_strided_slice %45 {offsets = [0, 0], sizes = [8, 72], strides = [1, 1]} : vector<8x288xf32> to vector<8x72xf32>
    %47 = vector.extract_strided_slice %45 {offsets = [0, 72], sizes = [8, 72], strides = [1, 1]} : vector<8x288xf32> to vector<8x72xf32>
    %48 = arith.maximumf %46, %47 : vector<8x72xf32>
    %49 = vector.extract_strided_slice %45 {offsets = [0, 144], sizes = [8, 72], strides = [1, 1]} : vector<8x288xf32> to vector<8x72xf32>
    %50 = vector.extract_strided_slice %45 {offsets = [0, 216], sizes = [8, 72], strides = [1, 1]} : vector<8x288xf32> to vector<8x72xf32>
    %51 = arith.maximumf %49, %50 : vector<8x72xf32>
    %52 = arith.maximumf %48, %51 : vector<8x72xf32>
    %53 = vector.broadcast %3 : vector<8x1xf32> to vector<8x72xf32>
    %54 = arith.addf %52, %53 : vector<8x72xf32>
    %cst_7 = arith.constant 0.000000e+00 : f32
    %55 = vector.broadcast %cst_7 : f32 to vector<8x72xf32>
    %56 = arith.maximumf %54, %55 : vector<8x72xf32>
    %c0_8 = arith.constant 0 : index
    %c0_9 = arith.constant 0 : index
    %c0_10 = arith.constant 0 : index
    %c0_11 = arith.constant 0 : index
    %57 = vector.load %arg5[%c0_8, %c0_9, %c0_10, %c0_11] : memref<1x1x8x72xf32, #tpu.memory_space<vmem>>, vector<1x1x8x72xf32>
    %58 = vector.shape_cast %57 : vector<1x1x8x72xf32> to vector<8x72xf32>
    %59 = vector.shape_cast %56 : vector<8x72xf32> to vector<1x1x8x72xf32>
    tpu.vector_store %arg5[%c0_8, %c0_9, %c0_10, %c0_11], %59 {strides = array<i32>} : memref<1x1x8x72xf32, #tpu.memory_space<vmem>>, vector<1x1x8x72xf32>,
    return
  }
  func.func @transform_0(%arg0: i32, %arg1: i32) -> (i32, i32, i32, i32) {
    %c0_i32 = arith.constant 0 : i32
    %c0_i32_0 = arith.constant 0 : i32
    %c0_i32_1 = arith.constant 0 : i32
    return %arg0, %arg1, %c0_i32, %c0_i32_0 : i32, i32, i32, i32
  }
  func.func @transform_1(%arg0: i32, %arg1: i32) -> (i32, i32) {
    %c0_i32 = arith.constant 0 : i32
    %c0_i32_0 = arith.constant 0 : i32
    %c0_i32_1 = arith.constant 0 : i32
    return %c0_i32, %c0_i32_0 : i32, i32
  }
  func.func @transform_2(%arg0: i32, %arg1: i32) -> (i32, i32) {
    %c0_i32 = arith.constant 0 : i32
    %c0_i32_0 = arith.constant 0 : i32
    %c0_i32_1 = arith.constant 0 : i32
    return %c0_i32, %c0_i32_0 : i32, i32
  }
  func.func @transform_3(%arg0: i32, %arg1: i32) -> (i32, i32, i32, i32) {
    %c0_i32 = arith.constant 0 : i32
    %c0_i32_0 = arith.constant 0 : i32
    %c0_i32_1 = arith.constant 0 : i32
    return %arg0, %arg1, %c0_i32, %c0_i32_0 : i32, i32, i32, i32
  }
}

</mosaic_0001>

<llo_original>
// kernel: tpu_custom_call.1
$region0: #{tpu_custom_call.1}
  #allocation0 [shape = 'u32[]', space=smem, size = 0x4, offset = 0x4, fixed_abs, tag = 'smem constant byte address 0x4 - core index']
  #allocation1 [shape = 'u32[72,128]{1,0:T(1,128)}', space=vmem, size = 0x9000, scoped, tag = 'internal scratch']
  %s0 = inlined_call_operand.hbm [shape: bf16[2,1,16,128], index: 0, kind: input, shape index: {}]
  %s1 = inlined_call_operand.vmem [shape: bf16[8,36], index: 1, kind: input, shape index: {}]
  %s2 = inlined_call_operand.vmem [shape: f32[8,1], index: 2, kind: input, shape index: {}]
  %s3 = inlined_call_operand.hbm [shape: f32[2,1,8,72], index: 3, kind: output, shape index: {}]
  %s4 = sld [smem:[#allocation0]]
  $region49: #{tpu_custom_call.1} parent=0
    _
  %s6 = ssub.s32 1, %s4
  %s7 = scalar_select 0, %s6, %s4
  $region1: #{tpu_custom_call.1} parent=0
    #allocation2 [shape = 'u8[8192]{0}', space=vmem, size = 0x2000, scoped, tag = 'input window, operand 0']
    #allocation3 [shape = 's32[2]{0}', space=sflag, size = 0x8, scoped, tag = 'scoped memory for tpu_custom_call.1']
    #allocation4 [shape = 's32[2]{0}', space=sflag, size = 0x8, scoped, tag = 'scoped memory for tpu_custom_call.1']
    #allocation5 [shape = 'u8[8192]{0}', space=vmem, size = 0x2000, scoped, tag = 'output window, operand 0']
    %8 = vsyncpa [#allocation3], 0
    %s9 = scalar_lea.sflag [#allocation3], 1
    %10 = vsyncpa %s9, 0
    %11 = vsyncpa [#allocation4], 0
    %s12 = scalar_lea.sflag [#allocation4], 1
    %13 = vsyncpa %s12, 0
    loop: start=0, step=1, limit=4
    $region2: #{tpu_custom_call.1} parent=1 // loop_pre_header
      _
    $region3: #{tpu_custom_call.1} parent=1 // loop_header
      %s15 = sphi 0, %s19
      %p16 = scmp.ge.s32.totalorder %s15, 4
      %s22 = sphi 0, %s34
      %s23 = sphi 0, %s30
      %s24 = sphi 0, %s22
      %s25 = sphi 0, %s23
      %s26 = sphi 0, %s24
      %s27 = sphi 0, %s25
      %s39 = sphi 0, %s41
      %s42 = sphi 0, %s39
      %s43 = sphi 0, %s42
      %s59 = sphi 0, %s43
      %s63 = sphi 0, %s63
      %s65 = sphi 0, %s63
      %s66 = sphi 0, %s65
      %s80 = sphi 0, %s66
      %s84 = sphi 0, %s84
      %s86 = sphi 0, %s84
      %s87 = sphi 0, %s86
      %s101 = sphi 0, %s87
      %s109 = sphi 0, %s111
      %s112 = sphi 0, %s109
      %s113 = sphi 0, %s112
      %s129 = sphi 0, %s113
    $region4: #{tpu_custom_call.1} parent=1 // loop_header_branch
      %18 = sbr.rel (%p16) target = $region8
    $region5: #{tpu_custom_call.1} parent=1 // loop_body
      %s20 = ssub.s32 %s15, 1
      %s21 = ssub.s32 %s15, 2
      %s28 = sadd.s32 1, %s23
      %p29 = scmp.ge.s32.totalorder %s28, 1
      %s30 = scalar_select %p29, 0, %s28
      %s31 = sadd.s32 1, %s22
      %s32 = scalar_select %p29, %s31, %s22
      %p33 = scmp.ge.s32.totalorder %s32, 2
      %s34 = scalar_select %p33, 0, %s32
      %s35 = ssub.s32 %s22, %s34
      %s36 = ssub.s32 %s23, %s30
      %s37 = sor.u32 %s35, %s36
      %p38 = scmp.eq.s32.totalorder %s37, 0
      %s40 = sadd.s32 %s39, 1
      %s41 = scalar_select %p38, %s39, %s40
      %p44 = pneg %p38
      %p45 = scmp.eq.s32.totalorder %s15, 1
      %p46 = por %p44, %p45
      %p47 = scmp.ne.s32.totalorder %s39, %s42
      %p48 = scmp.eq.s32.totalorder %s15, 0
      %p49 = por %p47, %p48
      %p50 = scmp.ne.s32.totalorder %s39, %s42
      %p51 = scmp.eq.s32.totalorder %s20, 1
      %p52 = por %p50, %p51
      %p53 = scmp.ne.s32.totalorder %s42, %s43
      %p54 = scmp.eq.s32.totalorder %s20, 0
      %p55 = por %p53, %p54
      %p56 = scmp.ne.s32.totalorder %s42, %s43
      %p57 = scmp.eq.s32.totalorder %s21, 1
      %p58 = por %p56, %p57
      %p60 = scmp.ne.s32.totalorder %s43, %s59
      %p61 = scmp.eq.s32.totalorder %s21, 0
      %p62 = por %p60, %p61
      %s64 = sadd.s32 %s63, 1
      %p67 = scmp.eq.s32.totalorder %s15, 1
      %p68 = scmp.ne.s32.totalorder %s63, %s65
      %p69 = scmp.eq.s32.totalorder %s15, 0
      %p70 = por %p68, %p69
      %p71 = scmp.ne.s32.totalorder %s63, %s65
      %p72 = scmp.eq.s32.totalorder %s20, 1
      %p73 = por %p71, %p72
      %p74 = scmp.ne.s32.totalorder %s65, %s66
      %p75 = scmp.eq.s32.totalorder %s20, 0
      %p76 = por %p74, %p75
      %p77 = scmp.ne.s32.totalorder %s65, %s66
      %p78 = scmp.eq.s32.totalorder %s21, 1
      %p79 = por %p77, %p78
      %p81 = scmp.ne.s32.totalorder %s66, %s80
      %p82 = scmp.eq.s32.totalorder %s21, 0
      %p83 = por %p81, %p82
      %s85 = sadd.s32 %s84, 1
      %p88 = scmp.eq.s32.totalorder %s15, 1
      %p89 = scmp.ne.s32.totalorder %s84, %s86
      %p90 = scmp.eq.s32.totalorder %s15, 0
      %p91 = por %p89, %p90
      %p92 = scmp.ne.s32.totalorder %s84, %s86
      %p93 = scmp.eq.s32.totalorder %s20, 1
      %p94 = por %p92, %p93
      %p95 = scmp.ne.s32.totalorder %s86, %s87
      %p96 = scmp.eq.s32.totalorder %s20, 0
      %p97 = por %p95, %p96
      %p98 = scmp.ne.s32.totalorder %s86, %s87
      %p99 = scmp.eq.s32.totalorder %s21, 1
      %p100 = por %p98, %p99
      %p102 = scmp.ne.s32.totalorder %s87, %s101
      %p103 = scmp.eq.s32.totalorder %s21, 0
      %p104 = por %p102, %p103
      %s105 = ssub.s32 %s22, %s34
      %s106 = ssub.s32 %s23, %s30
      %s107 = sor.u32 %s105, %s106
      %p108 = scmp.eq.s32.totalorder %s107, 0
      %s110 = sadd.s32 %s109, 1
      %s111 = scalar_select %p108, %s109, %s110
      %p114 = pneg %p108
      %p115 = scmp.eq.s32.totalorder %s15, 1
      %p116 = por %p114, %p115
      %p117 = scmp.ne.s32.totalorder %s109, %s112
      %p118 = scmp.eq.s32.totalorder %s15, 0
      %p119 = por %p117, %p118
      %p120 = scmp.ne.s32.totalorder %s109, %s112
      %p121 = scmp.eq.s32.totalorder %s20, 1
      %p122 = por %p120, %p121
      %p123 = scmp.ne.s32.totalorder %s112, %s113
      %p124 = scmp.eq.s32.totalorder %s20, 0
      %p125 = por %p123, %p124
      %p126 = scmp.ne.s32.totalorder %s112, %s113
      %p127 = scmp.eq.s32.totalorder %s21, 1
      %p128 = por %p126, %p127
      %p130 = scmp.ne.s32.totalorder %s113, %s129
      %p131 = scmp.eq.s32.totalorder %s21, 0
      %p132 = por %p130, %p131
      %p133 = scmp.le.s32.totalorder 1, %s15
      %p134 = scmp.lt.s32.totalorder %s15, 3
      %p135 = pnand %p133, %p134
      %p136 = pneg %p135
      // Predicated region
      $region9: #{tpu_custom_call.1} parent=5 // pred_check
        _
      $region10: #{tpu_custom_call.1} parent=5 // pred_check_branch
        %138 = sbr.rel (%p135) target = $region12
      $region11: #{tpu_custom_call.1} parent=5 // pred_region
        %s139 = ssub.s32 %s15, 1
        // Predicated region
        $region13: #{tpu_custom_call.1} parent=11 // pred_check
          %p140 = pneg %p76
        $region14: #{tpu_custom_call.1} parent=11 // pred_check_branch
          %142 = sbr.rel (%p140) target = $region16
        $region15: #{tpu_custom_call.1} parent=11 // pred_region
          _
        $region16: #{tpu_custom_call.1} parent=11 // pred_fallthru
          _
        // Predicated region
        $region17: #{tpu_custom_call.1} parent=11 // pred_check
          %p143 = pneg %p97
        $region18: #{tpu_custom_call.1} parent=11 // pred_check_branch
          %145 = sbr.rel (%p143) target = $region20
        $region19: #{tpu_custom_call.1} parent=11 // pred_region
          _
        $region20: #{tpu_custom_call.1} parent=11 // pred_fallthru
          _
      $region12: #{tpu_custom_call.1} parent=5 // pred_fallthru
        _
      %p146 = scmp.lt.s32.totalorder %s15, 2
      // Predicated region
      $region21: #{tpu_custom_call.1} parent=5 // pred_check
        %p147 = pneg %p146
      $region22: #{tpu_custom_call.1} parent=5 // pred_check_branch
        %149 = sbr.rel (%p147) target = $region24
      $region23: #{tpu_custom_call.1} parent=5 // pred_region
        // Predicated region
        $region25: #{tpu_custom_call.1} parent=23 // pred_check
          %p150 = pneg %p49
        $region26: #{tpu_custom_call.1} parent=23 // pred_check_branch
          %152 = sbr.rel (%p150) target = $region28
        $region27: #{tpu_custom_call.1} parent=23 // pred_region
          %s153 = sand.u32 %s39, 1
          %s154 = scalar_lea.sflag [#allocation3], %s153
          %s155 = sand.u32 %s39, 1
          %s156 = smul.addr %s155, 8
          %s157 = scalar_lea.vmem [#allocation2], %s156
          %159 = vsyncadd %s154, 0
          %s160 = smul.addr %s23, 2
          %s161 = smul.addr %s22, 2
          %s162 = sadd.s32 %s160, %s161
          %s163 = smul.addr %s162, 4
          %s164 = scalar_lea.hbm %s0, %s163
          %s165 = sshll.u32 %s164, 4
          %s166 = int_to_ptr.hbm [resolvable:$true] %s165
          %s167 = sshll.u32 %s157, 4
          %s168 = int_to_ptr.vmem [resolvable:$true] %s167
          %173 = dma.hbm_to_vmem [thread:$0]  %s166, 128, %s168, %s154, 64, 64, 4
        $region28: #{tpu_custom_call.1} parent=23 // pred_fallthru
          _
      $region24: #{tpu_custom_call.1} parent=5 // pred_fallthru
        _
      %p174 = scmp.le.s32.totalorder 1, %s15
      %p175 = scmp.lt.s32.totalorder %s15, 3
      %p176 = pnand %p174, %p175
      %p177 = pneg %p176
      // Predicated region
      $region29: #{tpu_custom_call.1} parent=5 // pred_check
        _
      $region30: #{tpu_custom_call.1} parent=5 // pred_check_branch
        %179 = sbr.rel (%p176) target = $region32
      $region31: #{tpu_custom_call.1} parent=5 // pred_region
        %s180 = ssub.s32 %s15, 1
        %s181 = sand.u32 %s42, 1
        %s182 = scalar_lea.sflag [#allocation3], %s181
        %s183 = sand.u32 %s42, 1
        %s184 = smul.addr %s183, 8
        %s185 = scalar_lea.vmem [#allocation2], %s184
        // Predicated region
        $region33: #{tpu_custom_call.1} parent=31 // pred_check
          %p186 = pneg %p55
        $region34: #{tpu_custom_call.1} parent=31 // pred_check_branch
          %188 = sbr.rel (%p186) target = $region36
        $region35: #{tpu_custom_call.1} parent=31 // pred_region
          %190 = dma.done %s182, 128
        $region36: #{tpu_custom_call.1} parent=31 // pred_fallthru
          _
        %s191 = sand.u32 %s42, 1
        %s192 = scalar_lea.sflag [#allocation3], %s191
        %s193 = sand.u32 %s42, 1
        %s194 = smul.addr %s193, 8
        %s195 = scalar_lea.vmem [#allocation2], %s194
        %p196 = pneg %p55
        %p197 = pneg %p52
        %p198 = pneg %p76
        %p199 = pneg %p73
        %p200 = pneg %p97
        %p201 = pneg %p94
        %p202 = pneg %p125
        %p203 = pneg %p122
        %s204 = sand.u32 %s112, 1
        %s205 = scalar_lea.sflag [#allocation4], %s204
        %s206 = sand.u32 %s112, 1
        %s207 = smul.addr %s206, 8
        %s208 = scalar_lea.vmem [#allocation5], %s207
        %v210 = vld [vmem:[%s185] sm:$0xf]
        %v211 = vld [vmem:[%s185 + $0x4] sm:$0xf]
        %v212 = vld [vmem:[%s1] sm:$0xf]
        %v213 = vld [vmem:[%s2] sm:$0xff]
        %v215 = vunpack.c.l.b16 %v210
        %v216 = vpack.c.b16 %v215, %v215
        %217 = vrot.lane.b32.xlu0 %v216, 127
        %v218 = vpop.permute.xlu0 %217
        %v220 = vunpack.c.l.b16 %v211
        %v221 = vpack.c.b16 %v220, %v220
        %v222 = vrot.slane %v221, 2
        %v223 = vrot.slane %v221, 6
        %224 = vrot.lane.b32.xlu0 %v223, 127
        %v225 = vpop.permute.xlu0 %224
        %226 = vrot.lane.b32.xlu0 %v216, 119
        %v227 = vpop.permute.xlu0 %226
        %228 = vrot.lane.b32.xlu0 %v216, 118
        %v229 = vpop.permute.xlu0 %228
        %vm230 = vcmask 1041408
        %vm232 = vcmask 1043456
        %v234 = vsel %vm232, %v210, %v218
        %vm235 = vcmask 1045504
        %v237 = vsel %vm235, %v234, %v222
        %v239 = vsel %vm230, %v222, %v225
        %v241 = vsel %vm232, %v239, %v227
        %v242 = vsel %vm235, %v241, %v227
        %v243 = vrot.slane %v216, 2
        %v244 = vrot.slane %v216, 6
        %245 = vrot.lane.b32.xlu0 %v244, 127
        %v246 = vpop.permute.xlu0 %245
        %247 = vrot.lane.b32.xlu0 %v221, 127
        %v248 = vpop.permute.xlu0 %247
        %249 = vrot.lane.b32.xlu0 %v244, 119
        %v250 = vpop.permute.xlu0 %249
        %251 = vrot.lane.b32.xlu0 %v243, 118
        %v252 = vpop.permute.xlu0 %251
        %v255 = vsel %vm230, %v243, %v246
        %v256 = vsel %vm232, %v255, %v246
        %v258 = vsel %vm235, %v256, %v221
        %v261 = vsel %vm232, %v248, %v250
        %v263 = vsel %vm235, %v261, %v252
        %264 = vrot.lane.b32.xlu0 %v243, 119
        %v265 = vpop.permute.xlu0 %264
        %266 = vrot.lane.b32.xlu0 %v244, 118
        %v267 = vpop.permute.xlu0 %266
        %268 = vrot.lane.b32.xlu0 %v221, 119
        %v269 = vpop.permute.xlu0 %268
        %270 = vrot.lane.b32.xlu0 %v221, 118
        %v271 = vpop.permute.xlu0 %270
        %v273 = vsel %vm232, %v211, %v248
        %v275 = vsel %vm235, %v273, %v265
        %v277 = vsel %vm230, %v265, %v267
        %v279 = vsel %vm232, %v277, %v269
        %v280 = vsel %vm235, %v279, %v269
        %281 = vrot.lane.b32.xlu0 %v223, 119
        %v282 = vpop.permute.xlu0 %281
        %283 = vrot.lane.b32.xlu0 %v222, 118
        %v284 = vpop.permute.xlu0 %283
        %v285 = vsel %vm232, %v239, %v225
        %v286 = vsel %vm235, %v285, %v227
        %v289 = vsel %vm232, %v229, %v282
        %v291 = vsel %vm235, %v289, %v284
        %294 = vrot.lane.b32.xlu0 %v258, 72
        %v295 = vpop.permute.xlu0 %294
        %296 = vrot.lane.b32.xlu0 %v263, 72
        %v297 = vpop.permute.xlu0 %296
        %298 = vrot.lane.b32.xlu0 %v252, 72
        %v299 = vpop.permute.xlu0 %298
        %302 = vrot.lane.b32.xlu0 %v275, 16
        %v303 = vpop.permute.xlu0 %302
        %304 = vrot.lane.b32.xlu0 %v280, 16
        %v305 = vpop.permute.xlu0 %304
        %306 = vrot.lane.b32.xlu0 %v271, 16
        %v307 = vpop.permute.xlu0 %306
        %310 = vrot.lane.b32.xlu0 %v286, 88
        %v311 = vpop.permute.xlu0 %310
        %312 = vrot.lane.b32.xlu0 %v291, 88
        %v313 = vpop.permute.xlu0 %312
        %314 = vrot.lane.b32.xlu0 %v284, 88
        %v315 = vpop.permute.xlu0 %314
        %vm318 = vcmask 588800
        %v320 = vsel %vm318, %v237, %v295
        %v323 = vsel %vm318, %v242, %v297
        %v326 = vsel %vm318, %v229, %v299
        %vm327 = vcmask 130048
        %v329 = vsel %vm327, %v295, %v303
        %v331 = vsel %vm327, %v297, %v305
        %v333 = vsel %vm327, %v299, %v307
        %vm334 = vcmask 719872
        %v336 = vsel %vm334, %v329, %v311
        %v339 = vsel %vm334, %v331, %v313
        %v342 = vsel %vm334, %v333, %v315
        %vm343 = vcmask 293888
        %v345 = vsel %vm343, %v212, 0
        %v347 = vsel %vm230, %v326, 0
        %v349 = vsel %vm230, %v342, 0
        %v351 = vsel %vm230, %v315, 0
        %353 = vmatpush.bf16.msra.mxu0 0
        %354 = vmatpush.bf16.msra.mxu0 0
        %355 = vmatpush.bf16.msra.mxu0 0
        %356 = vmatpush.bf16.msra.mxu0 0
        %357 = vmatpush.bf16.msra.mxu0 0
        %358 = vmatpush.bf16.msra.mxu0 %v347
        %359 = vmatpush.bf16.msra.mxu0 %v323
        %360 = vmatpush.bf16.msra.mxu0 %v320
        %361 = vmatmul.bf16.gmra.mxu0 %v345
        %v362 = vpop.f32.mrf.mxu0
        %v363 = vadd.f32 0.0, %v362
        %v364 = vpop.f32.mrf.mxu0
        %365 = vdwg.mxu0
        %366 = vmatpush.bf16.msra.mxu0 0
        %367 = vmatpush.bf16.msra.mxu0 0
        %368 = vmatpush.bf16.msra.mxu0 0
        %369 = vmatpush.bf16.msra.mxu0 0
        %370 = vmatpush.bf16.msra.mxu0 0
        %371 = vmatpush.bf16.msra.mxu0 %v349
        %372 = vmatpush.bf16.msra.mxu0 %v339
        %373 = vmatpush.bf16.msra.mxu0 %v336
        %374 = vmatmul.bf16.gmra.mxu0 %v345
        %v375 = vpop.f32.mrf.mxu0
        %v376 = vadd.f32 0.0, %v375
        %v377 = vpop.f32.mrf.mxu0
        %378 = vdwg.mxu0
        %379 = vmatpush.bf16.msra.mxu0 0
        %380 = vmatpush.bf16.msra.mxu0 0
        %381 = vmatpush.bf16.msra.mxu0 0
        %382 = vmatpush.bf16.msra.mxu0 0
        %383 = vmatpush.bf16.msra.mxu0 0
        %384 = vmatpush.bf16.msra.mxu0 %v351
        %385 = vmatpush.bf16.msra.mxu0 %v313
        %386 = vmatpush.bf16.msra.mxu0 %v311
        %387 = vmatmul.bf16.gmra.mxu0 %v345
        %v388 = vpop.f32.mrf.mxu0
        %v389 = vadd.f32 0.0, %v388
        %v390 = vpop.f32.mrf.mxu0
        %391 = vdwg.mxu0
        %394 = vrot.lane.b32.xlu0 %v363, 56
        %v395 = vpop.permute.xlu0 %394
        %396 = vrot.lane.b32.xlu0 %v376, 56
        %v397 = vpop.permute.xlu0 %396
        %vm398 = vcmask 457728
        %v399 = vsel %vm398, %v395, %v397
        %v401 = vmax.f32 %v363, %v399
        %403 = vrot.lane.b32.xlu0 %v389, 56
        %v404 = vpop.permute.xlu0 %403
        %v405 = vsel %vm398, %v397, %v404
        %v407 = vmax.f32 %v376, %v405
        %409 = vrot.lane.b32.xlu0 %v407, 112
        %v410 = vpop.permute.xlu0 %409
        %v412 = vmax.f32 %v401, %v410
        %414 = vset.pattern.permute.xlu0 0
        %415 = vperm.xlu0 %414, %v213
        %v416 = vpop.permute.xlu0 %415
        %v418 = vadd.f32 %v412, %v416
        %v419 = vmax.f32 %v418, 0.0
        %420 = vst.msk [vmem:[%s208] sm:$0xff] %vm318, %v419
        %s421 = sand.u32 %s112, 1
        %s422 = scalar_lea.sflag [#allocation4], %s421
        %s423 = sand.u32 %s112, 1
        %s424 = smul.addr %s423, 8
        %s425 = scalar_lea.vmem [#allocation5], %s424
        // Predicated region
        $region37: #{tpu_custom_call.1} parent=31 // pred_check
          %p426 = pneg %p122
        $region38: #{tpu_custom_call.1} parent=31 // pred_check_branch
          %428 = sbr.rel (%p426) target = $region40
        $region39: #{tpu_custom_call.1} parent=31 // pred_region
          %430 = vsyncadd %s422, 0
          %s431 = sadd.s32 %s25, %s24
          %s432 = smul.addr %s431, 8
          %s433 = scalar_lea.hbm %s3, %s432
          %s435 = sshll.u32 %s425, 4
          %s436 = int_to_ptr.vmem [resolvable:$true] %s435
          %s437 = sshll.u32 %s433, 4
          %s438 = int_to_ptr.hbm [resolvable:$true] %s437
          %440 = dma.vmem_to_hbm [thread:$0]  %s436, 128, %s438, %s422
        $region40: #{tpu_custom_call.1} parent=31 // pred_fallthru
          _
      $region32: #{tpu_custom_call.1} parent=5 // pred_fallthru
        _
      %p441 = scmp.le.s32.totalorder 2, %s15
      // Predicated region
      $region41: #{tpu_custom_call.1} parent=5 // pred_check
        %p442 = pneg %p441
      $region42: #{tpu_custom_call.1} parent=5 // pred_check_branch
        %444 = sbr.rel (%p442) target = $region44
      $region43: #{tpu_custom_call.1} parent=5 // pred_region
        %s445 = ssub.s32 %s15, 2
        // Predicated region
        $region45: #{tpu_custom_call.1} parent=43 // pred_check
          %p446 = pneg %p128
        $region46: #{tpu_custom_call.1} parent=43 // pred_check_branch
          %448 = sbr.rel (%p446) target = $region48
        $region47: #{tpu_custom_call.1} parent=43 // pred_region
          %s449 = sand.u32 %s113, 1
          %s450 = scalar_lea.sflag [#allocation4], %s449
          %s451 = sand.u32 %s113, 1
          %s452 = smul.addr %s451, 8
          %s453 = scalar_lea.vmem [#allocation5], %s452
          %455 = dma.done %s450, 128
        $region48: #{tpu_custom_call.1} parent=43 // pred_fallthru
          _
      $region44: #{tpu_custom_call.1} parent=5 // pred_fallthru
        _
    $region6: #{tpu_custom_call.1} parent=1 // loop_footer
      %s19 = sadd.s32 1, %s15
    $region7: #{tpu_custom_call.1} parent=1 // loop_footer_branch
      %14 = sbr.rel target = $region3
    $region8: #{tpu_custom_call.1} parent=1 // loop_exit
      _
    %456 = vsyncpa [#allocation3], 1
    %s457 = scalar_lea.sflag [#allocation3], 1
    %458 = vsyncpa %s457, 1
    %459 = vsyncpa [#allocation4], 1
    %s460 = scalar_lea.sflag [#allocation4], 1
    %461 = vsyncpa %s460, 1

</llo_original>
